<compile_context>
chip_gen: v6e
topology: v6e:2x2x1
jax: 0.10.0
libtpu: 0.0.40
codegen_flags: <defaults>
</compile_context>

<pallas_src>
import numpy as np
import jax
import jax.numpy as jnp
from jax.experimental import pallas as pl
from jax.experimental.pallas import tpu as pltpu

# Logical (PyTorch) hidden sizes.
HID1 = 200
HID2 = 100
# Lane-padded sizes used inside the kernel (multiples of 128).
HID1_P = 256
HID2_P = 128


def _pad_cols(x, width):
    """Zero-pad the last dim of a 1-D/2-D array to `width`."""
    if x.ndim == 1:
        return jnp.pad(x, (0, width - x.shape[0]))
    return jnp.pad(x, ((0, 0), (0, width - x.shape[-1])))


def init_linear(key, in_feat, out_feat, in_pad, out_pad):
    """PyTorch nn.Linear default init: U(-1/sqrt(fan_in), 1/sqrt(fan_in)).

    Weights are stored transposed, zero-padded to (in_pad, out_pad) and cast
    to bf16 (MXU-native, halves weight DMA bytes).  Bias stays f32.
    """
    kw, kb = jax.random.split(key)
    bound = 1.0 / np.sqrt(in_feat)
    w = jax.random.uniform(kw, (in_feat, out_feat), jnp.float32, -bound, bound)
    b = jax.random.uniform(kb, (out_feat,), jnp.float32, -bound, bound)
    w = jnp.pad(w, ((0, in_pad - in_feat), (0, out_pad - out_feat)))
    b = _pad_cols(b, out_pad)
    return w.astype(jnp.bfloat16), b


def make_generator_params(key, in_dim, out_shape):
    out_dim = int(np.prod(out_shape))
    out_p = max(128, ((out_dim + 127) // 128) * 128)   # lane-pad output dim

    k1, k2, k3 = jax.random.split(key, 3)
    w1, b1 = init_linear(k1, in_dim, HID1, in_dim, HID1_P)
    w2, b2 = init_linear(k2, HID1, HID2, HID1_P, HID2_P)
    w3, b3 = init_linear(k3, HID2, out_dim, HID2_P, out_p)

    gamma = _pad_cols(jnp.ones((HID2,), jnp.float32), HID2_P)   # BN weight default
    beta = _pad_cols(jnp.zeros((HID2,), jnp.float32), HID2_P)   # BN bias default

    # Fuse all small per-feature vectors into one lane-dense (1, K) f32 input:
    #   [ b1 (256) | b2 (128) | gamma (128) | beta (128) | b3 (out_p) ]
    vec = jnp.concatenate([b1, b2, gamma, beta, b3]).reshape(1, -1)

    return dict(w1=w1, w2=w2, w3=w3, vec=vec, out_p=out_p, out_dim=out_dim)


def generator_forward(z, params, out_shape):
    """Pallas forward pass. `out_shape` is an int (as the PyTorch view implies)."""
    batch = z.shape[0]
    out_dim = int(np.prod(out_shape))
    out_p = int(params["out_p"])
    assert out_dim == int(params["out_dim"])

    # Static offsets into the fused vector input (all multiples of 128).
    o_b2 = HID1_P
    o_gamma = HID1_P + HID2_P
    o_beta = HID1_P + 2 * HID2_P
    o_b3 = HID1_P + 3 * HID2_P

    def kernel(z_ref, w1_ref, w2_ref, w3_ref, vec_ref, out_ref):
        neg = jnp.float32(0.2)
        eps = jnp.float32(0.8)   # BatchNorm1d(out_feat, 0.8): 2nd positional arg is eps

        b1 = vec_ref[:, 0:HID1_P]
        b2 = vec_ref[:, o_b2:o_b2 + HID2_P]
        gamma = vec_ref[:, o_gamma:o_gamma + HID2_P]
        beta = vec_ref[:, o_beta:o_beta + HID2_P]
        b3 = vec_ref[:, o_b3:o_b3 + out_p]

        # --- Linear(in_dim, 200) + LeakyReLU(0.2) ---  (bf16 MXU, f32 accum)
        h1 = jnp.dot(z_ref[...].astype(jnp.bfloat16), w1_ref[...],
                     preferred_element_type=jnp.float32)
        h1 = h1 + b1
        h1 = jnp.maximum(h1, neg * h1)

        # --- Linear(200, 100) ---
        h2 = jnp.dot(h1.astype(jnp.bfloat16), w2_ref[...],
                     preferred_element_type=jnp.float32)
        h2 = h2 + b2

        # --- BatchNorm1d(100, eps=0.8): training-mode batch stats, biased var,
        #     computed in a single pass (one cross-sublane reduction sweep) ---
        n = jnp.float32(h2.shape[0])
        mean = jnp.sum(h2, axis=0, keepdims=True) / n
        ex2 = jnp.sum(h2 * h2, axis=0, keepdims=True) / n
        var = ex2 - mean * mean
        h2 = (h2 - mean) * jax.lax.rsqrt(var + eps)
        h2 = h2 * gamma + beta

        # --- LeakyReLU(0.2) ---
        h2 = jnp.maximum(h2, neg * h2)

        # --- Linear(100, out_dim) + Tanh ---  (128-wide lane-dense store)
        o = jnp.dot(h2.astype(jnp.bfloat16), w3_ref[...],
                    preferred_element_type=jnp.float32)
        out_ref[...] = jnp.tanh(o + b3)

    vmem = lambda: pl.BlockSpec(memory_space=pltpu.MemorySpace.VMEM)
    out = pl.pallas_call(
        kernel,
        out_shape=jax.ShapeDtypeStruct((batch, out_p), jnp.float32),
        in_specs=[vmem() for _ in range(5)],
        out_specs=vmem(),
    )(z, params["w1"], params["w2"], params["w3"], params["vec"])

    # Drop the zero-padded output lanes (tanh(0)=0) and apply the PyTorch
    # out.view(B, out_shape) contract.
    return out[:, :out_dim].reshape(batch, out_dim)


if __name__ == "__main__":
    key = jax.random.PRNGKey(0)
    k_params, k_z = jax.random.split(key)

    batch = 64           # small, sublane-aligned demo batch
    g_in_dim = 32        # latent dim
    g_out_shape = 64     # int, as required by out.view(B, out_shape)

    params = make_generator_params(k_params, g_in_dim, g_out_shape)
    z = jax.random.normal(k_z, (batch, g_in_dim), jnp.float32)

    out = generator_forward(z, params, g_out_shape)
    out = jax.block_until_ready(out)

    assert out.shape == (batch, g_out_shape)
    assert bool(jnp.all(jnp.isfinite(out)))
    assert bool(jnp.all(jnp.abs(out) <= 1.0))  # Tanh range
    print("KERNEL_OK")
</pallas_src>

<mosaic_0001>
module attributes {stable_mosaic.version = 11 : i64} {
  func.func @kernel(%arg0: memref<64x32xf32, #tpu.memory_space<vmem>>, %arg1: memref<32x256xbf16, #tpu.memory_space<vmem>>, %arg2: memref<256x128xbf16, #tpu.memory_space<vmem>>, %arg3: memref<128x128xbf16, #tpu.memory_space<vmem>>, %arg4: memref<1x768xf32, #tpu.memory_space<vmem>>, %arg5: memref<64x128xf32, #tpu.memory_space<vmem>>) attributes {dimension_semantics = [], scalar_prefetch = 0 : i64, scratch_operands = 0 : i64, tpu.core_type = #tpu.core_type<tc>} {
    %c0 = arith.constant 0 : index
    %c0_0 = arith.constant 0 : index
    %0 = vector.load %arg4[%c0, %c0_0] : memref<1x768xf32, #tpu.memory_space<vmem>>, vector<1x256xf32>
    %c0_1 = arith.constant 0 : index
    %c256 = arith.constant 256 : index
    %1 = vector.load %arg4[%c0_1, %c256] : memref<1x768xf32, #tpu.memory_space<vmem>>, vector<1x128xf32>
    %c0_2 = arith.constant 0 : index
    %c384 = arith.constant 384 : index
    %2 = vector.load %arg4[%c0_2, %c384] : memref<1x768xf32, #tpu.memory_space<vmem>>, vector<1x128xf32>
    %c0_3 = arith.constant 0 : index
    %c512 = arith.constant 512 : index
    %3 = vector.load %arg4[%c0_3, %c512] : memref<1x768xf32, #tpu.memory_space<vmem>>, vector<1x128xf32>
    %c0_4 = arith.constant 0 : index
    %c640 = arith.constant 640 : index
    %4 = vector.load %arg4[%c0_4, %c640] : memref<1x768xf32, #tpu.memory_space<vmem>>, vector<1x128xf32>
    %c0_5 = arith.constant 0 : index
    %c0_6 = arith.constant 0 : index
    %5 = vector.load %arg0[%c0_5, %c0_6] : memref<64x32xf32, #tpu.memory_space<vmem>>, vector<64x32xf32>
    %6 = arith.truncf %5 : vector<64x32xf32> to vector<64x32xbf16>
    %c0_7 = arith.constant 0 : index
    %c0_8 = arith.constant 0 : index
    %7 = vector.load %arg1[%c0_7, %c0_8] : memref<32x256xbf16, #tpu.memory_space<vmem>>, vector<32x256xbf16>
    %cst = arith.constant dense<0.000000e+00> : vector<64x256xf32>
    %8 = tpu.matmul %6, %7, %cst {dimension_numbers = #tpu.dot_dimension_numbers<[1], [0], [0], [1], [0, 0, 1, 1], [], []>} : vector<64x32xbf16>, vector<32x256xbf16>, vector<64x256xf32> -> vector<64x256xf32>
    %9 = vector.broadcast %0 : vector<1x256xf32> to vector<64x256xf32>
    %10 = arith.addf %8, %9 : vector<64x256xf32>
    %cst_9 = arith.constant 2.000000e-01 : f32
    %11 = vector.broadcast %cst_9 : f32 to vector<64x256xf32>
    %12 = arith.mulf %11, %10 : vector<64x256xf32>
    %13 = arith.maximumf %10, %12 : vector<64x256xf32>
    %14 = arith.truncf %13 : vector<64x256xf32> to vector<64x256xbf16>
    %c0_10 = arith.constant 0 : index
    %c0_11 = arith.constant 0 : index
    %15 = vector.load %arg2[%c0_10, %c0_11] : memref<256x128xbf16, #tpu.memory_space<vmem>>, vector<256x128xbf16>
    %cst_12 = arith.constant dense<0.000000e+00> : vector<64x128xf32>
    %16 = tpu.matmul %14, %15, %cst_12 {dimension_numbers = #tpu.dot_dimension_numbers<[1], [0], [0], [1], [0, 0, 1, 1], [], []>} : vector<64x256xbf16>, vector<256x128xbf16>, vector<64x128xf32> -> vector<64x128xf32>
    %17 = vector.broadcast %1 : vector<1x128xf32> to vector<64x128xf32>
    %18 = arith.addf %16, %17 : vector<64x128xf32>
    %cst_13 = arith.constant dense<0.000000e+00> : vector<128xf32>
    %19 = vector.multi_reduction <add>, %18, %cst_13 [0] : vector<64x128xf32> to vector<128xf32>
    %20 = vector.shape_cast %19 : vector<128xf32> to vector<1x128xf32>
    %cst_14 = arith.constant 6.400000e+01 : f32
    %21 = vector.broadcast %cst_14 : f32 to vector<1x128xf32>
    %22 = arith.divf %20, %21 : vector<1x128xf32>
    %23 = arith.mulf %18, %18 : vector<64x128xf32>
    %cst_15 = arith.constant dense<0.000000e+00> : vector<128xf32>
    %24 = vector.multi_reduction <add>, %23, %cst_15 [0] : vector<64x128xf32> to vector<128xf32>
    %25 = vector.shape_cast %24 : vector<128xf32> to vector<1x128xf32>
    %cst_16 = arith.constant 6.400000e+01 : f32
    %26 = vector.broadcast %cst_16 : f32 to vector<1x128xf32>
    %27 = arith.divf %25, %26 : vector<1x128xf32>
    %28 = arith.mulf %22, %22 : vector<1x128xf32>
    %29 = arith.subf %27, %28 : vector<1x128xf32>
    %30 = vector.broadcast %22 : vector<1x128xf32> to vector<64x128xf32>
    %31 = arith.subf %18, %30 : vector<64x128xf32>
    %cst_17 = arith.constant 8.000000e-01 : f32
    %32 = vector.broadcast %cst_17 : f32 to vector<1x128xf32>
    %33 = arith.addf %29, %32 : vector<1x128xf32>
    %34 = math.rsqrt %33 : vector<1x128xf32>
    %35 = vector.broadcast %34 : vector<1x128xf32> to vector<64x128xf32>
    %36 = arith.mulf %31, %35 : vector<64x128xf32>
    %37 = vector.broadcast %2 : vector<1x128xf32> to vector<64x128xf32>
    %38 = arith.mulf %36, %37 : vector<64x128xf32>
    %39 = vector.broadcast %3 : vector<1x128xf32> to vector<64x128xf32>
    %40 = arith.addf %38, %39 : vector<64x128xf32>
    %cst_18 = arith.constant 2.000000e-01 : f32
    %41 = vector.broadcast %cst_18 : f32 to vector<64x128xf32>
    %42 = arith.mulf %41, %40 : vector<64x128xf32>
    %43 = arith.maximumf %40, %42 : vector<64x128xf32>
    %44 = arith.truncf %43 : vector<64x128xf32> to vector<64x128xbf16>
    %c0_19 = arith.constant 0 : index
    %c0_20 = arith.constant 0 : index
    %45 = vector.load %arg3[%c0_19, %c0_20] : memref<128x128xbf16, #tpu.memory_space<vmem>>, vector<128x128xbf16>
    %cst_21 = arith.constant dense<0.000000e+00> : vector<64x128xf32>
    %46 = tpu.matmul %44, %45, %cst_21 {dimension_numbers = #tpu.dot_dimension_numbers<[1], [0], [0], [1], [0, 0, 1, 1], [], []>} : vector<64x128xbf16>, vector<128x128xbf16>, vector<64x128xf32> -> vector<64x128xf32>
    %47 = vector.broadcast %4 : vector<1x128xf32> to vector<64x128xf32>
    %48 = arith.addf %46, %47 : vector<64x128xf32>
    %49 = math.tanh %48 : vector<64x128xf32>
    %c0_22 = arith.constant 0 : index
    %c0_23 = arith.constant 0 : index
    %50 = vector.load %arg5[%c0_22, %c0_23] : memref<64x128xf32, #tpu.memory_space<vmem>>, vector<64x128xf32>
    tpu.vector_store %arg5[%c0_22, %c0_23], %49 {strides = array<i32>} : memref<64x128xf32, #tpu.memory_space<vmem>>, vector<64x128xf32>,
    return
  }
}

</mosaic_0001>

<llo_original>
// kernel: tpu_custom_call.1
$region0: #{tpu_custom_call.1}
  #allocation0 [shape = 'u32[]', space=smem, size = 0x4, offset = 0x4, fixed_abs, tag = 'smem constant byte address 0x4 - core index']
  #allocation1 [shape = 'u32[144,128]{1,0:T(1,128)}', space=vmem, size = 0x12000, scoped, tag = 'internal scratch']
  %s0 = inlined_call_operand.vmem [shape: f32[64,32], index: 0, kind: input, shape index: {}]
  %s1 = inlined_call_operand.vmem [shape: bf16[32,256], index: 1, kind: input, shape index: {}]
  %s2 = inlined_call_operand.hbm [shape: bf16[256,128], index: 2, kind: input, shape index: {}]
  %s3 = inlined_call_operand.vmem [shape: bf16[128,128], index: 3, kind: input, shape index: {}]
  %s4 = inlined_call_operand.vmem [shape: f32[1,768], index: 4, kind: input, shape index: {}]
  %s5 = inlined_call_operand.hbm [shape: f32[64,128], index: 5, kind: output, shape index: {}]
  %s6 = sld [smem:[#allocation0]]
  $region34: #{tpu_custom_call.1} parent=0
    _
  %s8 = ssub.s32 1, %s6
  %s9 = scalar_select 0, %s8, %s6
  $region1: #{tpu_custom_call.1} parent=0
    #allocation2 [shape = 'u8[65536]{0}', space=vmem, size = 0x10000, scoped, tag = 'input window, operand 2, single buffered']
    #allocation3 [shape = 's32[1]{0}', space=sflag, size = 0x4, scoped, tag = 'scoped memory for tpu_custom_call.1']
    #allocation4 [shape = 's32[1]{0}', space=sflag, size = 0x4, scoped, tag = 'scoped memory for tpu_custom_call.1']
    #allocation5 [shape = 'u8[32768]{0}', space=vmem, size = 0x8000, scoped, tag = 'output window, operand 0, single buffered']
    %10 = vsyncpa [#allocation3], 0
    %11 = vsyncpa [#allocation4], 0
    // Predicated region
    $region2: #{tpu_custom_call.1} parent=1 // pred_check
      _
    $region3: #{tpu_custom_call.1} parent=1 // pred_check_branch
      %13 = sbr.rel (0) target = $region5
    $region4: #{tpu_custom_call.1} parent=1 // pred_region
      _
    $region5: #{tpu_custom_call.1} parent=1 // pred_fallthru
      _
    // Predicated region
    $region6: #{tpu_custom_call.1} parent=1 // pred_check
      _
    $region7: #{tpu_custom_call.1} parent=1 // pred_check_branch
      %15 = sbr.rel (0) target = $region9
    $region8: #{tpu_custom_call.1} parent=1 // pred_region
      _
    $region9: #{tpu_custom_call.1} parent=1 // pred_fallthru
      _
    // Predicated region
    $region10: #{tpu_custom_call.1} parent=1 // pred_check
      _
    $region11: #{tpu_custom_call.1} parent=1 // pred_check_branch
      %17 = sbr.rel (0) target = $region13
    $region12: #{tpu_custom_call.1} parent=1 // pred_region
      %s19 = ssub.s32 2048, 2048
      %20 = vsyncadd [#allocation3], %s19
      %s21 = sshll.u32 [#allocation2], 4
      %s22 = int_to_ptr.vmem [resolvable:$true] %s21
      %27 = dma.hbm_to_vmem [thread:$0]  %s2, 2048, %s22, [#allocation3], 64, 64, 4
    $region13: #{tpu_custom_call.1} parent=1 // pred_fallthru
      _
    // Predicated region
    $region14: #{tpu_custom_call.1} parent=1 // pred_check
      _
    $region15: #{tpu_custom_call.1} parent=1 // pred_check_branch
      %29 = sbr.rel (0) target = $region17
    $region16: #{tpu_custom_call.1} parent=1 // pred_region
      _
    $region17: #{tpu_custom_call.1} parent=1 // pred_fallthru
      _
    // Predicated region
    $region18: #{tpu_custom_call.1} parent=1 // pred_check
      _
    $region19: #{tpu_custom_call.1} parent=1 // pred_check_branch
      %31 = sbr.rel (0) target = $region21
    $region20: #{tpu_custom_call.1} parent=1 // pred_region
      _
    $region21: #{tpu_custom_call.1} parent=1 // pred_fallthru
      _
    // Predicated region
    $region22: #{tpu_custom_call.1} parent=1 // pred_check
      _
    $region23: #{tpu_custom_call.1} parent=1 // pred_check_branch
      %33 = sbr.rel (0) target = $region25
    $region24: #{tpu_custom_call.1} parent=1 // pred_region
      %34 = dma.done [#allocation3], 2048
    $region25: #{tpu_custom_call.1} parent=1 // pred_fallthru
      _
    %v36 = vld [vmem:[%s4] sm:$0x3]
    %v37 = vld [vmem:[%s4 + $0x2] sm:$0x1]
    %v38 = vld [vmem:[%s4 + $0x3] sm:$0x1]
    %v39 = vld [vmem:[%s4 + $0x4] sm:$0x1]
    %v40 = vld [vmem:[%s4 + $0x5] sm:$0x1]
    %v41 = vld [vmem:[%s0] sm:$0xff]
    %v42 = vld [vmem:[%s0 + $0x8] sm:$0xff]
    %v43 = vld [vmem:[%s0 + $0x10] sm:$0xff]
    %v44 = vld [vmem:[%s0 + $0x18] sm:$0xff]
    %v45 = vld [vmem:[%s0 + $0x20] sm:$0xff]
    %v46 = vld [vmem:[%s0 + $0x28] sm:$0xff]
    %v47 = vld [vmem:[%s0 + $0x30] sm:$0xff]
    %v48 = vld [vmem:[%s0 + $0x38] sm:$0xff]
    %v49 = vpack.c.bf16 %v42, %v41
    %v50 = vpack.c.bf16 %v44, %v43
    %v51 = vpack.c.bf16 %v46, %v45
    %v52 = vpack.c.bf16 %v48, %v47
    %v53 = vld [vmem:[%s1] sm:$0xff]
    %v54 = vld [vmem:[%s1 + $0x8] sm:$0xff]
    %v55 = vld [vmem:[%s1 + $0x10] sm:$0xff]
    %v56 = vld [vmem:[%s1 + $0x18] sm:$0xff]
    %v58 = vlaneseq
    %v59 = vshrl.u32 %v58, 7
    %v60 = vsub.s32 0, %v59
    %v61 = vrot.slane %v36, %v60
    %v62 = vlaneseq
    %v63 = vshrl.u32 %v62, 7
    %v64 = vsub.s32 1, %v63
    %v65 = vrot.slane %v36, %v64
    %v72 = vunpack.c.l.b16 %v53
    %v73 = vunpack.c.h.b16 %v53
    %v74 = vunpack.c.l.b16 %v54
    %v75 = vunpack.c.h.b16 %v54
    %v76 = vunpack.c.l.b16 %v55
    %v77 = vunpack.c.h.b16 %v55
    %v78 = vunpack.c.l.b16 %v56
    %v79 = vunpack.c.h.b16 %v56
    %v80 = vpack.c.b16 %v74, %v72
    %v81 = vpack.c.b16 %v75, %v73
    %v82 = vpack.c.b16 %v78, %v76
    %v83 = vpack.c.b16 %v79, %v77
    %vm88 = vcmask 261120
    %v90 = vsel %vm88, %v49, 0
    %v93 = vsel %vm88, %v50, 0
    %v96 = vsel %vm88, %v51, 0
    %v99 = vsel %vm88, %v52, 0
    %101 = vmatprep.subr.bf16.mxu0 0
    %102 = vmatpush1.bf16.msra.mxu0 0
    %103 = vmatprep.subr.bf16.mxu0 0
    %104 = vmatpush1.bf16.msra.mxu0 0
    %105 = vmatprep.subr.bf16.mxu0 0
    %106 = vmatpush1.bf16.msra.mxu0 0
    %107 = vmatprep.subr.bf16.mxu0 0
    %108 = vmatpush1.bf16.msra.mxu0 0
    %109 = vmatprep.subr.bf16.mxu0 0
    %110 = vmatpush1.bf16.msra.mxu0 0
    %111 = vmatprep.subr.bf16.mxu0 0
    %112 = vmatpush1.bf16.msra.mxu0 0
    %113 = vmatprep.subr.bf16.mxu0 %v83
    %114 = vmatpush1.bf16.msra.mxu0 %v82
    %115 = vmatprep.subr.bf16.mxu0 %v81
    %116 = vmatpush1.bf16.msra.mxu0 %v80
    %117 = vmatprep.subr.bf16.mxu0 0
    %118 = vmatpush2.bf16.msra.mxu0 0
    %119 = vmatprep.subr.bf16.mxu0 0
    %120 = vmatpush2.bf16.msra.mxu0 0
    %121 = vmatprep.subr.bf16.mxu0 0
    %122 = vmatpush2.bf16.msra.mxu0 0
    %123 = vmatprep.subr.bf16.mxu0 0
    %124 = vmatpush2.bf16.msra.mxu0 0
    %125 = vmatprep.subr.bf16.mxu0 0
    %126 = vmatpush2.bf16.msra.mxu0 0
    %127 = vmatprep.subr.bf16.mxu0 0
    %128 = vmatpush2.bf16.msra.mxu0 0
    %129 = vmatprep.subr.bf16.mxu0 0
    %130 = vmatpush2.bf16.msra.mxu0 0
    %131 = vmatprep.subr.bf16.mxu0 0
    %132 = vmatpush2.bf16.msra.mxu0 0
    %133 = vmatprep.mubr.bf16.mxu0 0
    %134 = vmatmul.mubr.bf16.gmra.mxu0 %v90
    %v135 = vpop.f32.mrf.mxu0
    %v136 = vadd.f32 %v61, %v135
    %v137 = vpop.f32.mrf.mxu0
    %v138 = vadd.f32 %v65, %v137
    %v139 = vpop.f32.mrf.mxu0
    %v140 = vadd.f32 %v61, %v139
    %v141 = vpop.f32.mrf.mxu0
    %v142 = vadd.f32 %v65, %v141
    %143 = vmatprep.mubr.bf16.mxu0 0
    %144 = vmatmul.mubr.bf16.gmra.mxu0 %v93
    %v145 = vpop.f32.mrf.mxu0
    %v146 = vadd.f32 %v61, %v145
    %v147 = vpop.f32.mrf.mxu0
    %v148 = vadd.f32 %v65, %v147
    %v149 = vpop.f32.mrf.mxu0
    %v150 = vadd.f32 %v61, %v149
    %v151 = vpop.f32.mrf.mxu0
    %v152 = vadd.f32 %v65, %v151
    %153 = vmatprep.mubr.bf16.mxu0 0
    %154 = vmatmul.mubr.bf16.gmra.mxu0 %v96
    %v155 = vpop.f32.mrf.mxu0
    %v156 = vadd.f32 %v61, %v155
    %v157 = vpop.f32.mrf.mxu0
    %v158 = vadd.f32 %v65, %v157
    %v159 = vpop.f32.mrf.mxu0
    %v160 = vadd.f32 %v61, %v159
    %v161 = vpop.f32.mrf.mxu0
    %v162 = vadd.f32 %v65, %v161
    %163 = vmatprep.mubr.bf16.mxu0 0
    %164 = vmatmul.mubr.bf16.gmra.mxu0 %v99
    %v165 = vpop.f32.mrf.mxu0
    %v166 = vadd.f32 %v61, %v165
    %v167 = vpop.f32.mrf.mxu0
    %v168 = vadd.f32 %v65, %v167
    %v169 = vpop.f32.mrf.mxu0
    %v170 = vadd.f32 %v61, %v169
    %v171 = vpop.f32.mrf.mxu0
    %v172 = vadd.f32 %v65, %v171
    %173 = vdwg.mxu0
    %v174 = vmul.f32 %v136, 0.2
    %v175 = vmul.f32 %v138, 0.2
    %v176 = vmul.f32 %v140, 0.2
    %v177 = vmul.f32 %v142, 0.2
    %v178 = vmul.f32 %v146, 0.2
    %v179 = vmul.f32 %v148, 0.2
    %v180 = vmul.f32 %v150, 0.2
    %v181 = vmul.f32 %v152, 0.2
    %v182 = vmul.f32 %v156, 0.2
    %v183 = vmul.f32 %v158, 0.2
    %v184 = vmul.f32 %v160, 0.2
    %v185 = vmul.f32 %v162, 0.2
    %v186 = vmul.f32 %v166, 0.2
    %v187 = vmul.f32 %v168, 0.2
    %v188 = vmul.f32 %v170, 0.2
    %v189 = vmul.f32 %v172, 0.2
    %v190 = vmax.f32 %v136, %v174
    %v191 = vmax.f32 %v138, %v175
    %v192 = vmax.f32 %v140, %v176
    %v193 = vmax.f32 %v142, %v177
    %v194 = vmax.f32 %v146, %v178
    %v195 = vmax.f32 %v148, %v179
    %v196 = vmax.f32 %v150, %v180
    %v197 = vmax.f32 %v152, %v181
    %v198 = vmax.f32 %v156, %v182
    %v199 = vmax.f32 %v158, %v183
    %v200 = vmax.f32 %v160, %v184
    %v201 = vmax.f32 %v162, %v185
    %v202 = vmax.f32 %v166, %v186
    %v203 = vmax.f32 %v168, %v187
    %v204 = vmax.f32 %v170, %v188
    %v205 = vmax.f32 %v172, %v189
    %v206 = vpack.c.bf16 %v192, %v190
    %v207 = vpack.c.bf16 %v193, %v191
    %v208 = vpack.c.bf16 %v196, %v194
    %v209 = vpack.c.bf16 %v197, %v195
    %v210 = vpack.c.bf16 %v200, %v198
    %v211 = vpack.c.bf16 %v201, %v199
    %v212 = vpack.c.bf16 %v204, %v202
    %v213 = vpack.c.bf16 %v205, %v203
    %v214 = vld [vmem:[#allocation2] sm:$0xf]
    %v215 = vld [vmem:[#allocation2 + $0x4] sm:$0xf]
    %v216 = vld [vmem:[#allocation2 + $0x8] sm:$0xf]
    %v217 = vld [vmem:[#allocation2 + $0xc] sm:$0xf]
    %v218 = vld [vmem:[#allocation2 + $0x10] sm:$0xf]
    %v219 = vld [vmem:[#allocation2 + $0x14] sm:$0xf]
    %v220 = vld [vmem:[#allocation2 + $0x18] sm:$0xf]
    %v221 = vld [vmem:[#allocation2 + $0x1c] sm:$0xf]
    %v222 = vld [vmem:[#allocation2 + $0x20] sm:$0xf]
    %v223 = vld [vmem:[#allocation2 + $0x24] sm:$0xf]
    %v224 = vld [vmem:[#allocation2 + $0x28] sm:$0xf]
    %v225 = vld [vmem:[#allocation2 + $0x2c] sm:$0xf]
    %v226 = vld [vmem:[#allocation2 + $0x30] sm:$0xf]
    %v227 = vld [vmem:[#allocation2 + $0x34] sm:$0xf]
    %v228 = vld [vmem:[#allocation2 + $0x38] sm:$0xf]
    %v229 = vld [vmem:[#allocation2 + $0x3c] sm:$0xf]
    %v230 = vld [vmem:[#allocation2 + $0x40] sm:$0xf]
    %v231 = vld [vmem:[#allocation2 + $0x44] sm:$0xf]
    %v232 = vld [vmem:[#allocation2 + $0x48] sm:$0xf]
    %v233 = vld [vmem:[#allocation2 + $0x4c] sm:$0xf]
    %v234 = vld [vmem:[#allocation2 + $0x50] sm:$0xf]
    %v235 = vld [vmem:[#allocation2 + $0x54] sm:$0xf]
    %v236 = vld [vmem:[#allocation2 + $0x58] sm:$0xf]
    %v237 = vld [vmem:[#allocation2 + $0x5c] sm:$0xf]
    %v238 = vld [vmem:[#allocation2 + $0x60] sm:$0xf]
    %v239 = vld [vmem:[#allocation2 + $0x64] sm:$0xf]
    %v240 = vld [vmem:[#allocation2 + $0x68] sm:$0xf]
    %v241 = vld [vmem:[#allocation2 + $0x6c] sm:$0xf]
    %v242 = vld [vmem:[#allocation2 + $0x70] sm:$0xf]
    %v243 = vld [vmem:[#allocation2 + $0x74] sm:$0xf]
    %v244 = vld [vmem:[#allocation2 + $0x78] sm:$0xf]
    %v245 = vld [vmem:[#allocation2 + $0x7c] sm:$0xf]
    %v247 = vlaneseq
    %v248 = vshrl.u32 %v247, 7
    %v249 = vsub.s32 0, %v248
    %v250 = vrot.slane %v37, %v249
    %v284 = vunpack.c.l.b16 %v214
    %v285 = vunpack.c.l.b16 %v215
    %v286 = vunpack.c.l.b16 %v216
    %v287 = vunpack.c.l.b16 %v217
    %v288 = vunpack.c.l.b16 %v218
    %v289 = vunpack.c.l.b16 %v219
    %v290 = vunpack.c.l.b16 %v220
    %v291 = vunpack.c.l.b16 %v221
    %v292 = vunpack.c.l.b16 %v222
    %v293 = vunpack.c.l.b16 %v223
    %v294 = vunpack.c.l.b16 %v224
    %v295 = vunpack.c.l.b16 %v225
    %v296 = vunpack.c.l.b16 %v226
    %v297 = vunpack.c.l.b16 %v227
    %v298 = vunpack.c.l.b16 %v228
    %v299 = vunpack.c.l.b16 %v229
    %v300 = vunpack.c.l.b16 %v230
    %v301 = vunpack.c.l.b16 %v231
    %v302 = vunpack.c.l.b16 %v232
    %v303 = vunpack.c.l.b16 %v233
    %v304 = vunpack.c.l.b16 %v234
    %v305 = vunpack.c.l.b16 %v235
    %v306 = vunpack.c.l.b16 %v236
    %v307 = vunpack.c.l.b16 %v237
    %v308 = vunpack.c.l.b16 %v238
    %v309 = vunpack.c.l.b16 %v239
    %v310 = vunpack.c.l.b16 %v240
    %v311 = vunpack.c.l.b16 %v241
    %v312 = vunpack.c.l.b16 %v242
    %v313 = vunpack.c.l.b16 %v243
    %v314 = vunpack.c.l.b16 %v244
    %v315 = vunpack.c.l.b16 %v245
    %v316 = vpack.c.b16 %v285, %v284
    %v317 = vpack.c.b16 %v287, %v286
    %v318 = vpack.c.b16 %v289, %v288
    %v319 = vpack.c.b16 %v291, %v290
    %v320 = vpack.c.b16 %v293, %v292
    %v321 = vpack.c.b16 %v295, %v294
    %v322 = vpack.c.b16 %v297, %v296
    %v323 = vpack.c.b16 %v299, %v298
    %v324 = vpack.c.b16 %v301, %v300
    %v325 = vpack.c.b16 %v303, %v302
    %v326 = vpack.c.b16 %v305, %v304
    %v327 = vpack.c.b16 %v307, %v306
    %v328 = vpack.c.b16 %v309, %v308
    %v329 = vpack.c.b16 %v311, %v310
    %v330 = vpack.c.b16 %v313, %v312
    %v331 = vpack.c.b16 %v315, %v314
    %348 = vmatprep.subr.bf16.mxu0 0
    %349 = vmatpush1.bf16.msra.mxu0 %v323
    %350 = vmatprep.subr.bf16.mxu0 0
    %351 = vmatpush1.bf16.msra.mxu0 %v322
    %352 = vmatprep.subr.bf16.mxu0 0
    %353 = vmatpush1.bf16.msra.mxu0 %v321
    %354 = vmatprep.subr.bf16.mxu0 0
    %355 = vmatpush1.bf16.msra.mxu0 %v320
    %356 = vmatprep.subr.bf16.mxu0 0
    %357 = vmatpush1.bf16.msra.mxu0 %v319
    %358 = vmatprep.subr.bf16.mxu0 0
    %359 = vmatpush1.bf16.msra.mxu0 %v318
    %360 = vmatprep.subr.bf16.mxu0 0
    %361 = vmatpush1.bf16.msra.mxu0 %v317
    %362 = vmatprep.subr.bf16.mxu0 0
    %363 = vmatpush1.bf16.msra.mxu0 %v316
    %364 = vmatprep.subr.bf16.mxu0 0
    %365 = vmatpush2.bf16.msra.mxu0 %v331
    %366 = vmatprep.subr.bf16.mxu0 0
    %367 = vmatpush2.bf16.msra.mxu0 %v330
    %368 = vmatprep.subr.bf16.mxu0 0
    %369 = vmatpush2.bf16.msra.mxu0 %v329
    %370 = vmatprep.subr.bf16.mxu0 0
    %371 = vmatpush2.bf16.msra.mxu0 %v328
    %372 = vmatprep.subr.bf16.mxu0 0
    %373 = vmatpush2.bf16.msra.mxu0 %v327
    %374 = vmatprep.subr.bf16.mxu0 0
    %375 = vmatpush2.bf16.msra.mxu0 %v326
    %376 = vmatprep.subr.bf16.mxu0 0
    %377 = vmatpush2.bf16.msra.mxu0 %v325
    %378 = vmatprep.subr.bf16.mxu0 0
    %379 = vmatpush2.bf16.msra.mxu0 %v324
    %380 = vmatprep.mubr.bf16.mxu0 %v207
    %381 = vmatmul.mubr.bf16.gmra.mxu0 %v206
    %v382 = vpop.f32.mrf.mxu0
    %v383 = vadd.f32 %v250, %v382
    %v384 = vpop.f32.mrf.mxu0
    %v385 = vpop.f32.mrf.mxu0
    %v386 = vadd.f32 %v250, %v385
    %v387 = vpop.f32.mrf.mxu0
    %388 = vmatprep.mubr.bf16.mxu0 %v209
    %389 = vmatmul.mubr.bf16.gmra.mxu0 %v208
    %v390 = vpop.f32.mrf.mxu0
    %v391 = vadd.f32 %v250, %v390
    %v392 = vpop.f32.mrf.mxu0
    %v393 = vpop.f32.mrf.mxu0
    %v394 = vadd.f32 %v250, %v393
    %v395 = vpop.f32.mrf.mxu0
    %396 = vmatprep.mubr.bf16.mxu0 %v211
    %397 = vmatmul.mubr.bf16.gmra.mxu0 %v210
    %v398 = vpop.f32.mrf.mxu0
    %v399 = vadd.f32 %v250, %v398
    %v400 = vpop.f32.mrf.mxu0
    %v401 = vpop.f32.mrf.mxu0
    %v402 = vadd.f32 %v250, %v401
    %v403 = vpop.f32.mrf.mxu0
    %404 = vmatprep.mubr.bf16.mxu0 %v213
    %405 = vmatmul.mubr.bf16.gmra.mxu0 %v212
    %v406 = vpop.f32.mrf.mxu0
    %v407 = vadd.f32 %v250, %v406
    %v408 = vpop.f32.mrf.mxu0
    %v409 = vpop.f32.mrf.mxu0
    %v410 = vadd.f32 %v250, %v409
    %v411 = vpop.f32.mrf.mxu0
    %412 = vdwg.mxu0
    %v413 = vadd.f32 %v383, %v386
    %v414 = vadd.f32 %v413, %v391
    %v415 = vadd.f32 %v414, %v394
    %v416 = vadd.f32 %v415, %v399
    %v417 = vadd.f32 %v416, %v402
    %v418 = vadd.f32 %v417, %v407
    %v419 = vadd.f32 %v418, %v410
    %v420 = vrot.slane %v419, 4
    %v421 = vadd.f32 %v419, %v420
    %v422 = vrot.slane %v421, 2
    %v423 = vadd.f32 %v421, %v422
    %v424 = vrot.slane %v423, 1
    %v425 = vadd.f32 %v423, %v424
    %v426 = vrcp.pop 64.0
    %v427 = vmul.f32 %v425, %v426
    %v428 = vmul.f32 %v383, %v383
    %v429 = vmul.f32 %v386, %v386
    %v430 = vmul.f32 %v391, %v391
    %v431 = vmul.f32 %v394, %v394
    %v432 = vmul.f32 %v399, %v399
    %v433 = vmul.f32 %v402, %v402
    %v434 = vmul.f32 %v407, %v407
    %v435 = vmul.f32 %v410, %v410
    %v436 = vadd.f32 %v428, %v429
    %v437 = vadd.f32 %v436, %v430
    %v438 = vadd.f32 %v437, %v431
    %v439 = vadd.f32 %v438, %v432
    %v440 = vadd.f32 %v439, %v433
    %v441 = vadd.f32 %v440, %v434
    %v442 = vadd.f32 %v441, %v435
    %v443 = vrot.slane %v442, 4
    %v444 = vadd.f32 %v442, %v443
    %v445 = vrot.slane %v444, 2
    %v446 = vadd.f32 %v444, %v445
    %v447 = vrot.slane %v446, 1
    %v448 = vadd.f32 %v446, %v447
    %v449 = vmul.f32 %v448, %v426
    %v450 = vmul.f32 %v427, %v427
    %v451 = vsub.f32 %v449, %v450
    %v452 = vsub.f32 %v383, %v427
    %v453 = vsub.f32 %v386, %v427
    %v454 = vsub.f32 %v391, %v427
    %v455 = vsub.f32 %v394, %v427
    %v456 = vsub.f32 %v399, %v427
    %v457 = vsub.f32 %v402, %v427
    %v458 = vsub.f32 %v407, %v427
    %v459 = vsub.f32 %v410, %v427
    %v460 = vadd.f32 %v451, 0.8
    %v461 = vrsqrt.pop %v460
    %v462 = vmul.f32 %v452, %v461
    %v463 = vmul.f32 %v453, %v461
    %v464 = vmul.f32 %v454, %v461
    %v465 = vmul.f32 %v455, %v461
    %v466 = vmul.f32 %v456, %v461
    %v467 = vmul.f32 %v457, %v461
    %v468 = vmul.f32 %v458, %v461
    %v469 = vmul.f32 %v459, %v461
    %v471 = vlaneseq
    %v472 = vshrl.u32 %v471, 7
    %v473 = vsub.s32 0, %v472
    %v474 = vrot.slane %v38, %v473
    %v476 = vmul.f32 %v462, %v474
    %v477 = vmul.f32 %v463, %v474
    %v478 = vmul.f32 %v464, %v474
    %v479 = vmul.f32 %v465, %v474
    %v480 = vmul.f32 %v466, %v474
    %v481 = vmul.f32 %v467, %v474
    %v482 = vmul.f32 %v468, %v474
    %v483 = vmul.f32 %v469, %v474
    %v485 = vlaneseq
    %v486 = vshrl.u32 %v485, 7
    %v487 = vsub.s32 0, %v486
    %v488 = vrot.slane %v39, %v487
    %v490 = vadd.f32 %v476, %v488
    %v491 = vadd.f32 %v477, %v488
    %v492 = vadd.f32 %v478, %v488
    %v493 = vadd.f32 %v479, %v488
    %v494 = vadd.f32 %v480, %v488
    %v495 = vadd.f32 %v481, %v488
    %v496 = vadd.f32 %v482, %v488
    %v497 = vadd.f32 %v483, %v488
    %v498 = vmul.f32 %v490, 0.2
    %v499 = vmul.f32 %v491, 0.2
    %v500 = vmul.f32 %v492, 0.2
    %v501 = vmul.f32 %v493, 0.2
    %v502 = vmul.f32 %v494, 0.2
    %v503 = vmul.f32 %v495, 0.2
    %v504 = vmul.f32 %v496, 0.2
    %v505 = vmul.f32 %v497, 0.2
    %v506 = vmax.f32 %v490, %v498
    %v507 = vmax.f32 %v491, %v499
    %v508 = vmax.f32 %v492, %v500
    %v509 = vmax.f32 %v493, %v501
    %v510 = vmax.f32 %v494, %v502
    %v511 = vmax.f32 %v495, %v503
    %v512 = vmax.f32 %v496, %v504
    %v513 = vmax.f32 %v497, %v505
    %v514 = vpack.c.bf16 %v507, %v506
    %v515 = vpack.c.bf16 %v509, %v508
    %v516 = vpack.c.bf16 %v511, %v510
    %v517 = vpack.c.bf16 %v513, %v512
    %v518 = vld [vmem:[%s3] sm:$0xf]
    %v519 = vld [vmem:[%s3 + $0x4] sm:$0xf]
    %v520 = vld [vmem:[%s3 + $0x8] sm:$0xf]
    %v521 = vld [vmem:[%s3 + $0xc] sm:$0xf]
    %v522 = vld [vmem:[%s3 + $0x10] sm:$0xf]
    %v523 = vld [vmem:[%s3 + $0x14] sm:$0xf]
    %v524 = vld [vmem:[%s3 + $0x18] sm:$0xf]
    %v525 = vld [vmem:[%s3 + $0x1c] sm:$0xf]
    %v526 = vld [vmem:[%s3 + $0x20] sm:$0xf]
    %v527 = vld [vmem:[%s3 + $0x24] sm:$0xf]
    %v528 = vld [vmem:[%s3 + $0x28] sm:$0xf]
    %v529 = vld [vmem:[%s3 + $0x2c] sm:$0xf]
    %v530 = vld [vmem:[%s3 + $0x30] sm:$0xf]
    %v531 = vld [vmem:[%s3 + $0x34] sm:$0xf]
    %v532 = vld [vmem:[%s3 + $0x38] sm:$0xf]
    %v533 = vld [vmem:[%s3 + $0x3c] sm:$0xf]
    %v535 = vlaneseq
    %v536 = vshrl.u32 %v535, 7
    %v537 = vsub.s32 0, %v536
    %v538 = vrot.slane %v40, %v537
    %v556 = vunpack.c.l.b16 %v518
    %v557 = vunpack.c.l.b16 %v519
    %v558 = vunpack.c.l.b16 %v520
    %v559 = vunpack.c.l.b16 %v521
    %v560 = vunpack.c.l.b16 %v522
    %v561 = vunpack.c.l.b16 %v523
    %v562 = vunpack.c.l.b16 %v524
    %v563 = vunpack.c.l.b16 %v525
    %v564 = vunpack.c.l.b16 %v526
    %v565 = vunpack.c.l.b16 %v527
    %v566 = vunpack.c.l.b16 %v528
    %v567 = vunpack.c.l.b16 %v529
    %v568 = vunpack.c.l.b16 %v530
    %v569 = vunpack.c.l.b16 %v531
    %v570 = vunpack.c.l.b16 %v532
    %v571 = vunpack.c.l.b16 %v533
    %v572 = vpack.c.b16 %v557, %v556
    %v573 = vpack.c.b16 %v559, %v558
    %v574 = vpack.c.b16 %v561, %v560
    %v575 = vpack.c.b16 %v563, %v562
    %v576 = vpack.c.b16 %v565, %v564
    %v577 = vpack.c.b16 %v567, %v566
    %v578 = vpack.c.b16 %v569, %v568
    %v579 = vpack.c.b16 %v571, %v570
    %588 = vmatprep.subr.bf16.mxu0 0
    %589 = vmatpush1.bf16.msra.mxu0 %v579
    %590 = vmatprep.subr.bf16.mxu0 0
    %591 = vmatpush1.bf16.msra.mxu0 %v578
    %592 = vmatprep.subr.bf16.mxu0 0
    %593 = vmatpush1.bf16.msra.mxu0 %v577
    %594 = vmatprep.subr.bf16.mxu0 0
    %595 = vmatpush1.bf16.msra.mxu0 %v576
    %596 = vmatprep.subr.bf16.mxu0 0
    %597 = vmatpush1.bf16.msra.mxu0 %v575
    %598 = vmatprep.subr.bf16.mxu0 0
    %599 = vmatpush1.bf16.msra.mxu0 %v574
    %600 = vmatprep.subr.bf16.mxu0 0
    %601 = vmatpush1.bf16.msra.mxu0 %v573
    %602 = vmatprep.subr.bf16.mxu0 0
    %603 = vmatpush1.bf16.msra.mxu0 %v572
    %604 = vmatprep.subr.bf16.mxu0 0
    %605 = vmatpush2.bf16.msra.mxu0 0
    %606 = vmatprep.subr.bf16.mxu0 0
    %607 = vmatpush2.bf16.msra.mxu0 0
    %608 = vmatprep.subr.bf16.mxu0 0
    %609 = vmatpush2.bf16.msra.mxu0 0
    %610 = vmatprep.subr.bf16.mxu0 0
    %611 = vmatpush2.bf16.msra.mxu0 0
    %612 = vmatprep.subr.bf16.mxu0 0
    %613 = vmatpush2.bf16.msra.mxu0 0
    %614 = vmatprep.subr.bf16.mxu0 0
    %615 = vmatpush2.bf16.msra.mxu0 0
    %616 = vmatprep.subr.bf16.mxu0 0
    %617 = vmatpush2.bf16.msra.mxu0 0
    %618 = vmatprep.subr.bf16.mxu0 0
    %619 = vmatpush2.bf16.msra.mxu0 0
    %620 = vmatprep.mubr.bf16.mxu0 0
    %621 = vmatmul.mubr.bf16.gmra.mxu0 %v514
    %v622 = vpop.f32.mrf.mxu0
    %v623 = vadd.f32 %v538, %v622
    %v624 = vpop.f32.mrf.mxu0
    %v625 = vpop.f32.mrf.mxu0
    %v626 = vadd.f32 %v538, %v625
    %v627 = vpop.f32.mrf.mxu0
    %628 = vmatprep.mubr.bf16.mxu0 0
    %629 = vmatmul.mubr.bf16.gmra.mxu0 %v515
    %v630 = vpop.f32.mrf.mxu0
    %v631 = vadd.f32 %v538, %v630
    %v632 = vpop.f32.mrf.mxu0
    %v633 = vpop.f32.mrf.mxu0
    %v634 = vadd.f32 %v538, %v633
    %v635 = vpop.f32.mrf.mxu0
    %636 = vmatprep.mubr.bf16.mxu0 0
    %637 = vmatmul.mubr.bf16.gmra.mxu0 %v516
    %v638 = vpop.f32.mrf.mxu0
    %v639 = vadd.f32 %v538, %v638
    %v640 = vpop.f32.mrf.mxu0
    %v641 = vpop.f32.mrf.mxu0
    %v642 = vadd.f32 %v538, %v641
    %v643 = vpop.f32.mrf.mxu0
    %644 = vmatprep.mubr.bf16.mxu0 0
    %645 = vmatmul.mubr.bf16.gmra.mxu0 %v517
    %v646 = vpop.f32.mrf.mxu0
    %v647 = vadd.f32 %v538, %v646
    %v648 = vpop.f32.mrf.mxu0
    %v649 = vpop.f32.mrf.mxu0
    %v650 = vadd.f32 %v538, %v649
    %v651 = vpop.f32.mrf.mxu0
    %652 = vdwg.mxu0
    %v653 = vtanh.pop %v623
    %v654 = vtanh.pop %v626
    %v655 = vtanh.pop %v631
    %v656 = vtanh.pop %v634
    %v657 = vtanh.pop %v639
    %v658 = vtanh.pop %v642
    %v659 = vtanh.pop %v647
    %v660 = vtanh.pop %v650
    %661 = vst [vmem:[#allocation5] sm:$0xff] %v653
    %662 = vst [vmem:[#allocation5 + $0x8] sm:$0xff] %v654
    %663 = vst [vmem:[#allocation5 + $0x10] sm:$0xff] %v655
    %664 = vst [vmem:[#allocation5 + $0x18] sm:$0xff] %v656
    %665 = vst [vmem:[#allocation5 + $0x20] sm:$0xff] %v657
    %666 = vst [vmem:[#allocation5 + $0x28] sm:$0xff] %v658
    %667 = vst [vmem:[#allocation5 + $0x30] sm:$0xff] %v659
    %668 = vst [vmem:[#allocation5 + $0x38] sm:$0xff] %v660
    // Predicated region
    $region26: #{tpu_custom_call.1} parent=1 // pred_check
      _
    $region27: #{tpu_custom_call.1} parent=1 // pred_check_branch
      %670 = sbr.rel (0) target = $region29
    $region28: #{tpu_custom_call.1} parent=1 // pred_region
      %s672 = ssub.s32 1024, 1024
      %673 = vsyncadd [#allocation4], %s672
      %s674 = sshll.u32 [#allocation5], 4
      %s675 = int_to_ptr.vmem [resolvable:$true] %s674
      %680 = dma.vmem_to_hbm [thread:$0]  %s675, 1024, %s5, [#allocation4], 128, 128, 8
    $region29: #{tpu_custom_call.1} parent=1 // pred_fallthru
      _
    // Predicated region
    $region30: #{tpu_custom_call.1} parent=1 // pred_check
      _
    $region31: #{tpu_custom_call.1} parent=1 // pred_check_branch
      %682 = sbr.rel (0) target = $region33
    $region32: #{tpu_custom_call.1} parent=1 // pred_region
      %683 = dma.done [#allocation4], 1024
    $region33: #{tpu_custom_call.1} parent=1 // pred_fallthru
      _
    %684 = vsyncpa [#allocation3], 1
    %685 = vsyncpa [#allocation4], 1

</llo_original>
